<compile_context>
chip_gen: v7x
topology: tpu7x:2x2x1
jax: 0.10.0
libtpu: 0.0.40
codegen_flags: <defaults>
</compile_context>

<pallas_src>
import functools

import jax
import jax.numpy as jnp
from jax.experimental import pallas as pl
from jax.experimental.pallas import tpu as pltpu


# ---------------------------------------------------------------------------
# Chip-generation aware tuning knobs
# ---------------------------------------------------------------------------

def _detect_chip():
    try:
        kind = jax.devices()[0].device_kind.lower()
    except Exception:
        return "unknown"
    if "v7" in kind or "7x" in kind:
        return "v7"
    if "v6" in kind:
        return "v6"
    if "v5" in kind:
        return "v5"
    return "other"


_CHIP = _detect_chip()
_IS_MULTICORE_TC = _CHIP == "v7"          # 2 TensorCores per chip

if _CHIP == "v7":
    _VMEM_LIMIT_BYTES = 48 * 1024 * 1024  # 64 MiB physical VMEM
    _TARGET_F32_BLOCK_BYTES = 6 << 20     # ~6 MiB f32 footprint per x block
elif _CHIP in ("v5", "v6"):
    _VMEM_LIMIT_BYTES = 96 * 1024 * 1024  # 128 MiB physical VMEM
    _TARGET_F32_BLOCK_BYTES = 8 << 20
else:
    _VMEM_LIMIT_BYTES = 32 * 1024 * 1024  # conservative default
    _TARGET_F32_BLOCK_BYTES = 4 << 20

# On v7x make the batch axis shard across the two TensorCores.
_DIM_SEMANTICS = (pltpu.CORE_PARALLEL,) if _IS_MULTICORE_TC else (pltpu.PARALLEL,)


def _choose_tb(B, L, F):
    """Batch-tile so each block's f32 compute footprint is ~the target size."""
    per_batch_f32 = max(1, L * F * 4)
    tb = max(1, _TARGET_F32_BLOCK_BYTES // per_batch_f32)
    tb = min(tb, B)
    if _IS_MULTICORE_TC and B >= 2:
        # >=2 grid steps, rounded up to an even count for 2-core load balance.
        steps = pl.cdiv(B, tb)
        steps = max(2, steps + (steps % 2))
        tb = pl.cdiv(B, steps)
    return int(tb)


# ---------------------------------------------------------------------------
# Kernels
# ---------------------------------------------------------------------------

def _revin_norm_kernel(x_ref, w_ref, b_ref, y_ref, stats_ref, *, eps, length):
    # x_ref: (TB, L, F); w_ref/b_ref: (1, F); y_ref: (TB, L, F); stats: (TB, 2, F)
    x = x_ref[...].astype(jnp.float32)                      # (TB, L, F)

    # Two-pass stats (numerically safe; diff is only used inside the reduction).
    mean = jnp.mean(x, axis=1, keepdims=True)               # (TB, 1, F)
    diff = x - mean
    # torch.var(dim=1) default is unbiased -> divide by (L - 1).
    # (L == 1 yields inf/NaN, matching torch.)
    var = jnp.sum(diff * diff, axis=1, keepdims=True) / jnp.float32(length - 1)
    veps = var + jnp.float32(eps)                           # (TB, 1, F)
    inv_std = jax.lax.rsqrt(veps)                           # EUP slot (cheap)
    std = jnp.sqrt(veps)                                    # tiny slab, for output

    w = w_ref[...].astype(jnp.float32)[:, None, :]          # (1, 1, F)
    b = b_ref[...].astype(jnp.float32)[:, None, :]          # (1, 1, F)
    scale = inv_std * w                                     # fold affine weight
    t = b - mean * scale                                    # (TB, 1, F)

    # Single FMA per element on the big tile.
    y_ref[...] = (x * scale + t).astype(y_ref.dtype)

    stats_ref[:, 0:1, :] = mean.astype(stats_ref.dtype)
    stats_ref[:, 1:2, :] = std.astype(stats_ref.dtype)


def _revin_denorm_kernel(x_ref, w_ref, b_ref, mean_ref, std_ref, y_ref):
    # inverse: ((x - bias) / weight) * std + mean  ==  x * s + t
    # with s = std / weight, t = mean - bias * s   (computed on the tiny slab).
    x = x_ref[...].astype(jnp.float32)                      # (TB, L, F)
    w = w_ref[...].astype(jnp.float32)[:, None, :]          # (1, 1, F)
    b = b_ref[...].astype(jnp.float32)[:, None, :]          # (1, 1, F)
    mean = mean_ref[...].astype(jnp.float32)                # (TB, 1, F)
    std = std_ref[...].astype(jnp.float32)                  # (TB, 1, F)

    s = std / w                                             # raw weight, as in spec
    t = mean - b * s
    y_ref[...] = (x * s + t).astype(y_ref.dtype)            # one FMA per element


# ---------------------------------------------------------------------------
# Wrappers
# ---------------------------------------------------------------------------

def revin_norm(x, weight, bias, eps=1e-5):
    """x: [B, L, F]; weight/bias: [F]. Returns (y, mean, std), mean/std: [B,1,F]."""
    B, L, F = x.shape
    TB = _choose_tb(B, L, F)
    grid = (pl.cdiv(B, TB),)
    w2 = weight.reshape(1, F)
    b2 = bias.reshape(1, F)

    kernel = functools.partial(_revin_norm_kernel, eps=eps, length=L)

    grid_spec = pltpu.PrefetchScalarGridSpec(
        num_scalar_prefetch=0,
        grid=grid,
        in_specs=[
            pl.BlockSpec((TB, L, F), lambda i: (i, 0, 0)),
            pl.BlockSpec((1, F), lambda i: (0, 0)),
            pl.BlockSpec((1, F), lambda i: (0, 0)),
        ],
        out_specs=[
            pl.BlockSpec((TB, L, F), lambda i: (i, 0, 0)),
            pl.BlockSpec((TB, 2, F), lambda i: (i, 0, 0)),
        ],
    )
    y, stats = pl.pallas_call(
        kernel,
        grid_spec=grid_spec,
        out_shape=(
            jax.ShapeDtypeStruct((B, L, F), x.dtype),
            jax.ShapeDtypeStruct((B, 2, F), jnp.float32),
        ),
        compiler_params=pltpu.CompilerParams(
            dimension_semantics=_DIM_SEMANTICS,
            vmem_limit_bytes=_VMEM_LIMIT_BYTES,
        ),
    )(x, w2, b2)
    mean = stats[:, 0:1, :]
    std = stats[:, 1:2, :]
    return y, mean, std


def revin_denorm(x, weight, bias, mean, std):
    """x: [B, L, F]; mean/std: [B, 1, F] (as returned by revin_norm)."""
    B, L, F = x.shape
    TB = _choose_tb(B, L, F)
    grid = (pl.cdiv(B, TB),)
    w2 = weight.reshape(1, F)
    b2 = bias.reshape(1, F)

    grid_spec = pltpu.PrefetchScalarGridSpec(
        num_scalar_prefetch=0,
        grid=grid,
        in_specs=[
            pl.BlockSpec((TB, L, F), lambda i: (i, 0, 0)),
            pl.BlockSpec((1, F), lambda i: (0, 0)),
            pl.BlockSpec((1, F), lambda i: (0, 0)),
            pl.BlockSpec((TB, 1, F), lambda i: (i, 0, 0)),
            pl.BlockSpec((TB, 1, F), lambda i: (i, 0, 0)),
        ],
        out_specs=pl.BlockSpec((TB, L, F), lambda i: (i, 0, 0)),
    )
    y = pl.pallas_call(
        _revin_denorm_kernel,
        grid_spec=grid_spec,
        out_shape=jax.ShapeDtypeStruct((B, L, F), x.dtype),
        compiler_params=pltpu.CompilerParams(
            dimension_semantics=_DIM_SEMANTICS,
            vmem_limit_bytes=_VMEM_LIMIT_BYTES,
        ),
    )(x, w2, b2, mean, std)
    return y


# ---------------------------------------------------------------------------
# Self-test
# ---------------------------------------------------------------------------

def _check_case(key, B, L, F, eps=1e-5):
    x = jax.random.normal(key, (B, L, F), dtype=jnp.float32) * 3.0 + 1.5
    # nn.Parameter(torch.ones(F)) / nn.Parameter(torch.zeros(F)), slightly perturbed
    affine_weight = jnp.ones((F,), dtype=jnp.float32) + 0.1 * jnp.arange(F, dtype=jnp.float32) / F
    affine_bias = jnp.zeros((F,), dtype=jnp.float32) + 0.05

    y, mean, std = revin_norm(x, affine_weight, affine_bias, eps=eps)
    y = jax.block_until_ready(y)

    # Plain-JAX reference (unbiased variance, like torch.var default)
    ref_mean = jnp.mean(x, axis=1, keepdims=True)
    ref_var = jnp.var(x, axis=1, keepdims=True, ddof=1)
    ref_std = jnp.sqrt(ref_var + eps)
    ref_y = (x - ref_mean) / ref_std * affine_weight + affine_bias

    assert jnp.allclose(y, ref_y, atol=1e-5, rtol=1e-5), "norm mismatch"
    assert jnp.allclose(mean, ref_mean, atol=1e-5, rtol=1e-5), "mean mismatch"
    assert jnp.allclose(std, ref_std, atol=1e-5, rtol=1e-5), "std mismatch"

    # 'denorm' mode round-trip
    x_rec = revin_denorm(y, affine_weight, affine_bias, mean, std)
    x_rec = jax.block_until_ready(x_rec)
    assert jnp.allclose(x_rec, x, atol=1e-4, rtol=1e-4), "denorm round-trip mismatch"


if __name__ == "__main__":
    key = jax.random.PRNGKey(0)
    k1, k2 = jax.random.split(key)

    # Small shapes consistent with the module: [Batch, Length, Features]
    _check_case(k1, B=2, L=16, F=8)
    # Odd batch (exercises batch-tiling / partial-last-block path on v7x)
    _check_case(k2, B=5, L=24, F=16)

    print("KERNEL_OK")
</pallas_src>

<mosaic_0001>
module attributes {stable_mosaic.version = 11 : i64} {
  func.func @_revin_norm_kernel(%arg0: i32, %arg1: memref<2x16x8xf32, #tpu.memory_space<vmem>>, %arg2: memref<1x8xf32, #tpu.memory_space<vmem>>, %arg3: memref<1x8xf32, #tpu.memory_space<vmem>>, %arg4: memref<2x16x8xf32, #tpu.memory_space<vmem>>, %arg5: memref<2x2x8xf32, #tpu.memory_space<vmem>>) attributes {dimension_semantics = [#tpu.dimension_semantics<parallel>], iteration_bounds = array<i64: 1>, scalar_prefetch = 0 : i64, scratch_operands = 0 : i64, tpu.core_type = #tpu.core_type<tc>, window_params = [{transform_indices = @transform_0, window_bounds = array<i64: 2, 16, 8>}, {pipeline_mode = #tpu.pipeline_mode<synchronous>, transform_indices = @transform_1, window_bounds = array<i64: 1, 8>}, {pipeline_mode = #tpu.pipeline_mode<synchronous>, transform_indices = @transform_2, window_bounds = array<i64: 1, 8>}, {transform_indices = @transform_3, window_bounds = array<i64: 2, 16, 8>}, {transform_indices = @transform_4, window_bounds = array<i64: 2, 2, 8>}]} {
    %c0 = arith.constant 0 : index
    %c0_0 = arith.constant 0 : index
    %c0_1 = arith.constant 0 : index
    %0 = vector.load %arg1[%c0, %c0_0, %c0_1] : memref<2x16x8xf32, #tpu.memory_space<vmem>>, vector<2x16x8xf32>
    %cst = arith.constant dense<0.000000e+00> : vector<2x8xf32>
    %1 = vector.multi_reduction <add>, %0, %cst [1] : vector<2x16x8xf32> to vector<2x8xf32>
    %2 = vector.shape_cast %1 : vector<2x8xf32> to vector<2x1x8xf32>
    %cst_2 = arith.constant 1.600000e+01 : f32
    %3 = vector.broadcast %cst_2 : f32 to vector<2x1x8xf32>
    %4 = arith.divf %2, %3 : vector<2x1x8xf32>
    %5 = vector.broadcast %4 : vector<2x1x8xf32> to vector<2x16x8xf32>
    %6 = arith.subf %0, %5 : vector<2x16x8xf32>
    %7 = arith.mulf %6, %6 : vector<2x16x8xf32>
    %cst_3 = arith.constant dense<0.000000e+00> : vector<2x8xf32>
    %8 = vector.multi_reduction <add>, %7, %cst_3 [1] : vector<2x16x8xf32> to vector<2x8xf32>
    %9 = vector.shape_cast %8 : vector<2x8xf32> to vector<2x1x8xf32>
    %cst_4 = arith.constant 1.500000e+01 : f32
    %10 = vector.broadcast %cst_4 : f32 to vector<2x1x8xf32>
    %11 = arith.divf %9, %10 : vector<2x1x8xf32>
    %cst_5 = arith.constant 9.99999974E-6 : f32
    %12 = vector.broadcast %cst_5 : f32 to vector<2x1x8xf32>
    %13 = arith.addf %11, %12 : vector<2x1x8xf32>
    %14 = math.rsqrt %13 : vector<2x1x8xf32>
    %15 = math.sqrt %13 : vector<2x1x8xf32>
    %c0_6 = arith.constant 0 : index
    %c0_7 = arith.constant 0 : index
    %16 = vector.load %arg2[%c0_6, %c0_7] : memref<1x8xf32, #tpu.memory_space<vmem>>, vector<1x8xf32>
    %17 = vector.shape_cast %16 : vector<1x8xf32> to vector<1x1x8xf32>
    %c0_8 = arith.constant 0 : index
    %c0_9 = arith.constant 0 : index
    %18 = vector.load %arg3[%c0_8, %c0_9] : memref<1x8xf32, #tpu.memory_space<vmem>>, vector<1x8xf32>
    %19 = vector.shape_cast %18 : vector<1x8xf32> to vector<1x1x8xf32>
    %20 = vector.broadcast %17 : vector<1x1x8xf32> to vector<2x1x8xf32>
    %21 = arith.mulf %14, %20 : vector<2x1x8xf32>
    %22 = arith.mulf %4, %21 : vector<2x1x8xf32>
    %23 = vector.broadcast %19 : vector<1x1x8xf32> to vector<2x1x8xf32>
    %24 = arith.subf %23, %22 : vector<2x1x8xf32>
    %25 = vector.broadcast %21 : vector<2x1x8xf32> to vector<2x16x8xf32>
    %26 = arith.mulf %0, %25 : vector<2x16x8xf32>
    %27 = vector.broadcast %24 : vector<2x1x8xf32> to vector<2x16x8xf32>
    %28 = arith.addf %26, %27 : vector<2x16x8xf32>
    %c0_10 = arith.constant 0 : index
    %c0_11 = arith.constant 0 : index
    %c0_12 = arith.constant 0 : index
    %29 = vector.load %arg4[%c0_10, %c0_11, %c0_12] : memref<2x16x8xf32, #tpu.memory_space<vmem>>, vector<2x16x8xf32>
    tpu.vector_store %arg4[%c0_10, %c0_11, %c0_12], %28 {strides = array<i32>} : memref<2x16x8xf32, #tpu.memory_space<vmem>>, vector<2x16x8xf32>,
    %c0_13 = arith.constant 0 : index
    %c0_14 = arith.constant 0 : index
    %c0_15 = arith.constant 0 : index
    %30 = vector.load %arg5[%c0_13, %c0_14, %c0_15] : memref<2x2x8xf32, #tpu.memory_space<vmem>>, vector<2x1x8xf32>
    tpu.vector_store %arg5[%c0_13, %c0_14, %c0_15], %4 {strides = array<i32>} : memref<2x2x8xf32, #tpu.memory_space<vmem>>, vector<2x1x8xf32>,
    %c0_16 = arith.constant 0 : index
    %c1 = arith.constant 1 : index
    %c0_17 = arith.constant 0 : index
    %31 = vector.load %arg5[%c0_16, %c1, %c0_17] : memref<2x2x8xf32, #tpu.memory_space<vmem>>, vector<2x1x8xf32>
    tpu.vector_store %arg5[%c0_16, %c1, %c0_17], %15 {strides = array<i32>} : memref<2x2x8xf32, #tpu.memory_space<vmem>>, vector<2x1x8xf32>,
    return
  }
  func.func @transform_0(%arg0: i32) -> (i32, i32, i32) {
    %c0_i32 = arith.constant 0 : i32
    %c0_i32_0 = arith.constant 0 : i32
    %c0_i32_1 = arith.constant 0 : i32
    return %arg0, %c0_i32, %c0_i32_0 : i32, i32, i32
  }
  func.func @transform_1(%arg0: i32) -> (i32, i32) {
    %c0_i32 = arith.constant 0 : i32
    %c0_i32_0 = arith.constant 0 : i32
    %c0_i32_1 = arith.constant 0 : i32
    return %c0_i32, %c0_i32_0 : i32, i32
  }
  func.func @transform_2(%arg0: i32) -> (i32, i32) {
    %c0_i32 = arith.constant 0 : i32
    %c0_i32_0 = arith.constant 0 : i32
    %c0_i32_1 = arith.constant 0 : i32
    return %c0_i32, %c0_i32_0 : i32, i32
  }
  func.func @transform_3(%arg0: i32) -> (i32, i32, i32) {
    %c0_i32 = arith.constant 0 : i32
    %c0_i32_0 = arith.constant 0 : i32
    %c0_i32_1 = arith.constant 0 : i32
    return %arg0, %c0_i32, %c0_i32_0 : i32, i32, i32
  }
  func.func @transform_4(%arg0: i32) -> (i32, i32, i32) {
    %c0_i32 = arith.constant 0 : i32
    %c0_i32_0 = arith.constant 0 : i32
    %c0_i32_1 = arith.constant 0 : i32
    return %arg0, %c0_i32, %c0_i32_0 : i32, i32, i32
  }
}

</mosaic_0001>

<llo_original>
// kernel: tpu_custom_call.1
$region0: #{tpu_custom_call.1}
  #allocation0 [shape = 'u32[]', space=smem, size = 0x4, offset = 0x4, fixed_abs, tag = 'smem constant byte address 0x4 - core index']
  #allocation1 [shape = 'u32[144,128]{1,0:T(1,128)}', space=vmem, size = 0x12000, scoped, tag = 'internal scratch']
  %s0 = inlined_call_operand.vmem [shape: f32[2,16,8], index: 0, kind: input, shape index: {}]
  %s1 = inlined_call_operand.vmem [shape: f32[1,8], index: 1, kind: input, shape index: {}]
  %s2 = inlined_call_operand.vmem [shape: f32[1,8], index: 2, kind: input, shape index: {}]
  %s3 = inlined_call_operand.vmem [shape: f32[2,16,8], index: 3, kind: output, shape index: {0}]
  %s4 = inlined_call_operand.hbm [shape: f32[2,2,8], index: 4, kind: output, shape index: {1}]
  %5 = xla_tuple %s3, %s4
  %s6 = sld [smem:[#allocation0]]
  $region30: #{tpu_custom_call.1} parent=0
    _
  %s8 = ssub.s32 1, %s6
  %s9 = scalar_select 0, %s8, %s6
  $region1: #{tpu_custom_call.1} parent=0
    #allocation2 [shape = 'u8[2048]{0}', space=vmem, size = 0x800, scoped, tag = 'output window, operand 1, single buffered']
    #allocation3 [shape = 's32[1]{0}', space=sflag, size = 0x4, scoped, tag = 'scoped memory for tpu_custom_call.1']
    %10 = vsyncpa [#allocation3], 0
    // Predicated region
    $region2: #{tpu_custom_call.1} parent=1 // pred_check
      _
    $region3: #{tpu_custom_call.1} parent=1 // pred_check_branch
      %12 = sbr.rel (0) target = $region5
    $region4: #{tpu_custom_call.1} parent=1 // pred_region
      _
    $region5: #{tpu_custom_call.1} parent=1 // pred_fallthru
      _
    // Predicated region
    $region6: #{tpu_custom_call.1} parent=1 // pred_check
      _
    $region7: #{tpu_custom_call.1} parent=1 // pred_check_branch
      %14 = sbr.rel (0) target = $region9
    $region8: #{tpu_custom_call.1} parent=1 // pred_region
      _
    $region9: #{tpu_custom_call.1} parent=1 // pred_fallthru
      _
    // Predicated region
    $region10: #{tpu_custom_call.1} parent=1 // pred_check
      _
    $region11: #{tpu_custom_call.1} parent=1 // pred_check_branch
      %16 = sbr.rel (0) target = $region13
    $region12: #{tpu_custom_call.1} parent=1 // pred_region
      _
    $region13: #{tpu_custom_call.1} parent=1 // pred_fallthru
      _
    %v17 = vld [vmem:[%s0] sm:$0xff]
    %v18 = vld [vmem:[%s0 + $0x8] sm:$0xff]
    %v19 = vld [vmem:[%s0 + $0x10] sm:$0xff]
    %v20 = vld [vmem:[%s0 + $0x18] sm:$0xff]
    %vm21 = vcmask 64512
    %v22 = vsel %vm21, %v17, 0.0
    %v23 = vsel %vm21, %v18, 0.0
    %v24 = vadd.f32 %v22, %v23
    %v25 = vrot.slane %v24, 4
    %v26 = vadd.f32 %v24, %v25
    %v27 = vrot.slane %v26, 2
    %v28 = vadd.f32 %v26, %v27
    %v29 = vrot.slane %v28, 1
    %v30 = vadd.f32 %v28, %v29
    %v31 = vsel %vm21, %v19, 0.0
    %v32 = vsel %vm21, %v20, 0.0
    %v33 = vadd.f32 %v31, %v32
    %v34 = vrot.slane %v33, 4
    %v35 = vadd.f32 %v33, %v34
    %v36 = vrot.slane %v35, 2
    %v37 = vadd.f32 %v35, %v36
    %v38 = vrot.slane %v37, 1
    %v39 = vadd.f32 %v37, %v38
    %v40 = vrcp.pop 16.0
    %v41 = vmul.f32 %v30, %v40
    %v42 = vmul.f32 %v39, %v40
    %v43 = vsub.f32 %v17, %v41
    %v44 = vsub.f32 %v18, %v41
    %v45 = vsub.f32 %v19, %v42
    %v46 = vsub.f32 %v20, %v42
    %v47 = vmul.f32 %v43, %v43
    %v48 = vmul.f32 %v44, %v44
    %v49 = vmul.f32 %v45, %v45
    %v50 = vmul.f32 %v46, %v46
    %v51 = vsel %vm21, %v47, 0.0
    %v52 = vsel %vm21, %v48, 0.0
    %v53 = vadd.f32 %v51, %v52
    %v54 = vrot.slane %v53, 4
    %v55 = vadd.f32 %v53, %v54
    %v56 = vrot.slane %v55, 2
    %v57 = vadd.f32 %v55, %v56
    %v58 = vrot.slane %v57, 1
    %v59 = vadd.f32 %v57, %v58
    %v60 = vsel %vm21, %v49, 0.0
    %v61 = vsel %vm21, %v50, 0.0
    %v62 = vadd.f32 %v60, %v61
    %v63 = vrot.slane %v62, 4
    %v64 = vadd.f32 %v62, %v63
    %v65 = vrot.slane %v64, 2
    %v66 = vadd.f32 %v64, %v65
    %v67 = vrot.slane %v66, 1
    %v68 = vadd.f32 %v66, %v67
    %v69 = vrcp.pop 15.0
    %v70 = vmul.f32 %v59, %v69
    %v71 = vmul.f32 %v68, %v69
    %v72 = vadd.f32 %v70, 1e-05
    %v73 = vadd.f32 %v71, 1e-05
    %v74 = vrsqrt.pop %v72
    %v75 = vrsqrt.pop %v73
    %v76 = vrsqrt.pop %v72
    %v77 = vmul.f32 %v72, %v76
    %vm78 = vcmp.eq.f32.partialorder %v72, inf
    %v79 = vsel %vm78, %v72, %v77
    %vm80 = vcmp.eq.f32.partialorder %v72, 0.0
    %v81 = vand.u32 %v72, 2147483648
    %v82 = vsel %vm80, %v81, %v79
    %v83 = vrsqrt.pop %v73
    %v84 = vmul.f32 %v73, %v83
    %vm85 = vcmp.eq.f32.partialorder %v73, inf
    %v86 = vsel %vm85, %v73, %v84
    %vm87 = vcmp.eq.f32.partialorder %v73, 0.0
    %v88 = vand.u32 %v73, 2147483648
    %v89 = vsel %vm87, %v88, %v86
    %v90 = vld [vmem:[%s1] sm:$0x1]
    %v91 = vld [vmem:[%s2] sm:$0x1]
    %v92 = vmul.f32 %v74, %v90
    %v93 = vmul.f32 %v75, %v90
    %v94 = vmul.f32 %v41, %v92
    %v95 = vmul.f32 %v42, %v93
    %v96 = vsub.f32 %v91, %v94
    %v97 = vsub.f32 %v91, %v95
    %v98 = vlaneseq
    %v99 = vshrl.u32 %v98, 7
    %v100 = vsub.s32 0, %v99
    %v101 = vrot.slane %v92, %v100
    %v102 = vlaneseq
    %v103 = vshrl.u32 %v102, 7
    %v104 = vsub.s32 0, %v103
    %v105 = vrot.slane %v93, %v104
    %v106 = vmul.f32 %v17, %v101
    %v107 = vmul.f32 %v18, %v101
    %v108 = vmul.f32 %v19, %v105
    %v109 = vmul.f32 %v20, %v105
    %v112 = vlaneseq
    %v113 = vshrl.u32 %v112, 7
    %v114 = vsub.s32 0, %v113
    %v115 = vrot.slane %v96, %v114
    %v116 = vlaneseq
    %v117 = vshrl.u32 %v116, 7
    %v118 = vsub.s32 0, %v117
    %v119 = vrot.slane %v97, %v118
    %v122 = vadd.f32 %v106, %v115
    %v123 = vadd.f32 %v107, %v115
    %v124 = vadd.f32 %v108, %v119
    %v125 = vadd.f32 %v109, %v119
    %126 = vst.msk [vmem:[%s3] sm:$0xff] %vm21, %v122
    %127 = vst.msk [vmem:[%s3 + $0x8] sm:$0xff] %vm21, %v123
    %128 = vst.msk [vmem:[%s3 + $0x10] sm:$0xff] %vm21, %v124
    %129 = vst.msk [vmem:[%s3 + $0x18] sm:$0xff] %vm21, %v125
    %vm130 = vcmask 57344
    %131 = vst.msk [vmem:[#allocation2] sm:$0x1] %vm130, %v41
    %132 = vst.msk [vmem:[#allocation2 + $0x2] sm:$0x1] %vm130, %v42
    %133 = vst.msk [vmem:[#allocation2 + $0x1] sm:$0x1] %vm130, %v82
    %134 = vst.msk [vmem:[#allocation2 + $0x3] sm:$0x1] %vm130, %v89
    // Predicated region
    $region14: #{tpu_custom_call.1} parent=1 // pred_check
      _
    $region15: #{tpu_custom_call.1} parent=1 // pred_check_branch
      %136 = sbr.rel (0) target = $region17
    $region16: #{tpu_custom_call.1} parent=1 // pred_region
      _
    $region17: #{tpu_custom_call.1} parent=1 // pred_fallthru
      _
    // Predicated region
    $region18: #{tpu_custom_call.1} parent=1 // pred_check
      _
    $region19: #{tpu_custom_call.1} parent=1 // pred_check_branch
      %138 = sbr.rel (0) target = $region21
    $region20: #{tpu_custom_call.1} parent=1 // pred_region
      %s140 = ssub.s32 64, 64
      %141 = vsyncadd [#allocation3], %s140
      %s142 = sshll.u32 [#allocation2], 4
      %s143 = int_to_ptr.vmem [resolvable:$true] %s142
      %148 = dma.vmem_to_hbm [thread:$0]  %s143, 64, %s4, [#allocation3], 32, 32, 2
    $region21: #{tpu_custom_call.1} parent=1 // pred_fallthru
      _
    // Predicated region
    $region22: #{tpu_custom_call.1} parent=1 // pred_check
      _
    $region23: #{tpu_custom_call.1} parent=1 // pred_check_branch
      %150 = sbr.rel (0) target = $region25
    $region24: #{tpu_custom_call.1} parent=1 // pred_region
      _
    $region25: #{tpu_custom_call.1} parent=1 // pred_fallthru
      _
    // Predicated region
    $region26: #{tpu_custom_call.1} parent=1 // pred_check
      _
    $region27: #{tpu_custom_call.1} parent=1 // pred_check_branch
      %152 = sbr.rel (0) target = $region29
    $region28: #{tpu_custom_call.1} parent=1 // pred_region
      %153 = dma.done [#allocation3], 64
    $region29: #{tpu_custom_call.1} parent=1 // pred_fallthru
      _
    %154 = vsyncpa [#allocation3], 1

</llo_original>
